<compile_context>
chip_gen: v7x
topology: tpu7x:2x2x1
jax: 0.10.0
libtpu: 0.0.40
codegen_flags: <defaults>
</compile_context>

<pallas_src>
import functools

import jax
import jax.numpy as jnp
from jax.experimental import pallas as pl
from jax.experimental.pallas import tpu as pltpu

_PAD = 128  # lane-aligned zero halo on each side of the flattened spatial axis


def _decoder_kernel(x_ref, w1_ref, b1_ref, w2_ref, b2_ref, w3_ref, b3_ref,
                    o_ref, scr_ref, *, H, W, c_in, c_mid, c_out):
    """Fused Conv3x3+BN+ReLU -> Conv3x3+BN+ReLU -> Conv1x1+BN+ReLU (one image).

    x_ref : (1, c_in, H*W)        channel-major, spatial flattened on lanes
    w1_ref: (c_mid, 9*c_in)  bf16 (BN scale folded)   b1_ref: (c_mid, 1) f32
    w2_ref: (c_mid, 9*c_mid) bf16                     b2_ref: (c_mid, 1) f32
    w3_ref: (c_out, c_mid)   bf16                     b3_ref: (c_out, 1) f32
    o_ref : (1, c_out, H*W)
    scr_ref: (c_scr, 2*_PAD + H*W) f32 zero-halo scratch for the 3x3 taps
    """
    HW = H * W

    # Column index of every lane position (for the horizontal wrap masks).
    lane = jax.lax.broadcasted_iota(jnp.int32, (1, HW), 1)
    w_idx = lane % W
    valid_left = w_idx >= 1           # tap dx = -1 invalid at w == 0
    valid_right = w_idx <= W - 2      # tap dx = +1 invalid at w == W-1

    def conv3x3(cin, w_ref, b_ref):
        # scr_ref[0:cin, _PAD:_PAD+HW] holds the activation; the halo columns
        # are zero, so vertical (dy) out-of-range taps read zeros for free.
        taps = []
        for dy in (-1, 0, 1):
            for dx in (-1, 0, 1):
                s = _PAD + dy * W + dx
                p = scr_ref[0:cin, s:s + HW]          # static lane-offset slice
                if dx == -1:
                    p = jnp.where(valid_left, p, 0.0)
                elif dx == 1:
                    p = jnp.where(valid_right, p, 0.0)
                taps.append(p)
        w_mat = w_ref[...]                            # (cout, 9*cin) bf16
        if cin % 8 == 0:
            # Single im2col matmul: K = 9*cin, output (cout, HW) lane-dense.
            im2col = jnp.concatenate(taps, axis=0).astype(jnp.bfloat16)
            acc = jnp.dot(w_mat, im2col, preferred_element_type=jnp.float32)
        else:
            # Fallback (channel count not a sublane multiple): per-tap matmuls.
            acc = jnp.zeros((w_mat.shape[0], HW), jnp.float32)
            for t in range(9):
                acc = acc + jnp.dot(w_mat[:, t * cin:(t + 1) * cin],
                                    taps[t].astype(jnp.bfloat16),
                                    preferred_element_type=jnp.float32)
        return jnp.maximum(acc + b_ref[...], 0.0)     # BN bias + ReLU in f32

    # Zero the halo scratch every grid step (cannot init-once: with a
    # "parallel" grid each TensorCore owns its own scratch instance).
    scr_ref[...] = jnp.zeros(scr_ref.shape, scr_ref.dtype)

    # ---- block 1: 3x3 conv (c_in -> c_mid) + BN + ReLU ----------------------
    scr_ref[0:c_in, _PAD:_PAD + HW] = x_ref[0]        # lane-aligned store
    h1 = conv3x3(c_in, w1_ref, b1_ref)                # (c_mid, HW) f32, in VMEM

    # ---- block 2: 3x3 conv (c_mid -> c_mid) + BN + ReLU ---------------------
    scr_ref[0:c_mid, _PAD:_PAD + HW] = h1             # stays in VMEM, no HBM trip
    h2 = conv3x3(c_mid, w2_ref, b2_ref)               # (c_mid, HW) f32

    # ---- block 3: 1x1 conv (c_mid -> c_out) + BN + ReLU ---------------------
    acc = jnp.dot(w3_ref[...], h2.astype(jnp.bfloat16),
                  preferred_element_type=jnp.float32)
    o_ref[0] = jnp.maximum(acc + b3_ref[...], 0.0).astype(o_ref.dtype)


def decoder_forward(xs_nchw, params):
    """xs_nchw: list of NCHW float32 arrays (as in Decoder.forward). Returns NCHW."""
    x = jnp.concatenate(xs_nchw, axis=1) if len(xs_nchw) > 1 else xs_nchw[0]
    N, c_in, H, W = x.shape
    HW = H * W
    x_flat = x.reshape(N, c_in, HW)                   # free reshape (row-major)

    (w1, s1, b1), (w2, s2, b2), (w3, s3, b3) = params
    c_mid = w1.shape[0]
    c_out = w3.shape[0]

    def pack3x3(w_oihw, scale):
        # OIHW -> (O, kh*kw*I), BN scale folded in f32, then cast to bf16.
        wf = w_oihw * scale[:, None, None, None]
        return jnp.transpose(wf, (0, 2, 3, 1)).reshape(w_oihw.shape[0], -1) \
                  .astype(jnp.bfloat16)

    w1p = pack3x3(w1, s1)                                           # (c_mid, 9*c_in)
    w2p = pack3x3(w2, s2)                                           # (c_mid, 9*c_mid)
    w3p = (w3[:, :, 0, 0] * s3[:, None]).astype(jnp.bfloat16)       # (c_out, c_mid)
    b1p = b1.reshape(c_mid, 1).astype(jnp.float32)
    b2p = b2.reshape(c_mid, 1).astype(jnp.float32)
    b3p = b3.reshape(c_out, 1).astype(jnp.float32)

    c_scr = ((max(c_in, c_mid) + 7) // 8) * 8

    kernel = functools.partial(_decoder_kernel, H=H, W=W,
                               c_in=c_in, c_mid=c_mid, c_out=c_out)

    out_flat = pl.pallas_call(
        kernel,
        out_shape=jax.ShapeDtypeStruct((N, c_out, HW), jnp.float32),
        grid=(N,),
        in_specs=[
            pl.BlockSpec((1, c_in, HW), lambda n: (n, 0, 0)),
            pl.BlockSpec((c_mid, 9 * c_in), lambda n: (0, 0)),
            pl.BlockSpec((c_mid, 1), lambda n: (0, 0)),
            pl.BlockSpec((c_mid, 9 * c_mid), lambda n: (0, 0)),
            pl.BlockSpec((c_mid, 1), lambda n: (0, 0)),
            pl.BlockSpec((c_out, c_mid), lambda n: (0, 0)),
            pl.BlockSpec((c_out, 1), lambda n: (0, 0)),
        ],
        out_specs=pl.BlockSpec((1, c_out, HW), lambda n: (n, 0, 0)),
        scratch_shapes=[pltpu.VMEM((c_scr, HW + 2 * _PAD), jnp.float32)],
        compiler_params=pltpu.CompilerParams(
            dimension_semantics=("parallel",),
            vmem_limit_bytes=32 * 1024 * 1024,
        ),
    )(x_flat, w1p, b1p, w2p, b2p, w3p, b3p)

    return out_flat.reshape(N, c_out, H, W)           # free reshape


def init_decoder_params(key, in_channel, out_channel, eps=1e-5):
    """Synthetic parameters matching the module's shapes (conv bias=False)."""
    c_mid = out_channel // 2
    ks = jax.random.split(key, 3)

    def conv_w(k, cout, cin, ksz):
        fan_in = cin * ksz * ksz
        return (jax.random.normal(k, (cout, cin, ksz, ksz), jnp.float32)
                * (2.0 / fan_in) ** 0.5)

    def bn(c):
        # inference-mode BN with default running stats: mean=0, var=1, g=1, b=0
        gamma = jnp.ones((c,), jnp.float32)
        beta = jnp.zeros((c,), jnp.float32)
        mean = jnp.zeros((c,), jnp.float32)
        var = jnp.ones((c,), jnp.float32)
        scale = gamma / jnp.sqrt(var + eps)
        bias = beta - mean * scale
        return scale, bias

    return [
        (conv_w(ks[0], c_mid, in_channel, 3), *bn(c_mid)),
        (conv_w(ks[1], c_mid, c_mid, 3), *bn(c_mid)),
        (conv_w(ks[2], out_channel, c_mid, 1), *bn(out_channel)),
    ]


def _reference_forward(xs_nchw, params):
    """Pure-JAX reference mirroring the kernel numerics (bf16 MXU inputs)."""
    h = jnp.concatenate(xs_nchw, axis=1)
    for (w, scale, bias) in params:
        wf = (w * scale[:, None, None, None]).astype(jnp.bfloat16)
        y = jax.lax.conv_general_dilated(
            h.astype(jnp.bfloat16), wf, (1, 1), "SAME",
            dimension_numbers=("NCHW", "OIHW", "NCHW"),
            preferred_element_type=jnp.float32)
        h = jnp.maximum(y + bias[None, :, None, None], 0.0)
    return h


if __name__ == "__main__":
    key = jax.random.PRNGKey(0)
    kx1, kx2, kp = jax.random.split(key, 3)

    # Two NCHW feature maps (2, 4, 16, 16) concatenated -> in_channel = 8.
    x1 = jax.random.normal(kx1, (2, 4, 16, 16), jnp.float32)
    x2 = jax.random.normal(kx2, (2, 4, 16, 16), jnp.float32)
    in_channel, out_channel = 8, 16

    params = init_decoder_params(kp, in_channel, out_channel)

    out = jax.block_until_ready(decoder_forward([x1, x2], params))
    ref = jax.block_until_ready(_reference_forward([x1, x2], params))

    assert out.shape == (2, out_channel, 16, 16)
    # Both paths feed identical bf16 values to the MXU with f32 accumulation;
    # remaining differences are accumulation order + occasional 1-ulp bf16
    # rounding of the VMEM-resident intermediates.
    err = float(jnp.max(jnp.abs(out - ref)))
    assert jnp.allclose(out, ref, atol=2e-2, rtol=2e-2), err

    print("KERNEL_OK")
</pallas_src>

<mosaic_0001>
module attributes {stable_mosaic.version = 11 : i64} {
  func.func @_decoder_kernel(%arg0: i32, %arg1: memref<1x8x256xf32, #tpu.memory_space<vmem>>, %arg2: memref<8x72xbf16, #tpu.memory_space<vmem>>, %arg3: memref<8x1xf32, #tpu.memory_space<vmem>>, %arg4: memref<8x72xbf16, #tpu.memory_space<vmem>>, %arg5: memref<8x1xf32, #tpu.memory_space<vmem>>, %arg6: memref<16x8xbf16, #tpu.memory_space<vmem>>, %arg7: memref<16x1xf32, #tpu.memory_space<vmem>>, %arg8: memref<1x16x256xf32, #tpu.memory_space<vmem>>, %arg9: memref<8x512xf32, #tpu.memory_space<vmem>>) attributes {dimension_semantics = [#tpu.dimension_semantics<parallel>], iteration_bounds = array<i64: 2>, scalar_prefetch = 0 : i64, scratch_operands = 1 : i64, tpu.core_type = #tpu.core_type<tc>, window_params = [{transform_indices = @transform_0, window_bounds = array<i64: 1, 8, 256>}, {pipeline_mode = #tpu.pipeline_mode<synchronous>, transform_indices = @transform_1, window_bounds = array<i64: 8, 72>}, {pipeline_mode = #tpu.pipeline_mode<synchronous>, transform_indices = @transform_2, window_bounds = array<i64: 8, 1>}, {pipeline_mode = #tpu.pipeline_mode<synchronous>, transform_indices = @transform_3, window_bounds = array<i64: 8, 72>}, {pipeline_mode = #tpu.pipeline_mode<synchronous>, transform_indices = @transform_4, window_bounds = array<i64: 8, 1>}, {pipeline_mode = #tpu.pipeline_mode<synchronous>, transform_indices = @transform_5, window_bounds = array<i64: 16, 8>}, {pipeline_mode = #tpu.pipeline_mode<synchronous>, transform_indices = @transform_6, window_bounds = array<i64: 16, 1>}, {transform_indices = @transform_7, window_bounds = array<i64: 1, 16, 256>}]} {
    %0 = tpu.iota {dimensions = array<i32: 1>} : vector<1x256xi32>
    %c16_i32 = arith.constant 16 : i32
    %c0_i32 = arith.constant 0 : i32
    %1 = arith.cmpi eq, %c16_i32, %c0_i32 : i32
    %c1_i32 = arith.constant 1 : i32
    %2 = arith.select %1, %c1_i32, %c16_i32 : i32
    %3 = vector.broadcast %2 : i32 to vector<1x256xi32>
    %4 = arith.remsi %0, %3 : vector<1x256xi32>
    %c0_i32_0 = arith.constant 0 : i32
    %5 = vector.broadcast %c0_i32_0 : i32 to vector<1x256xi32>
    %6 = arith.cmpi ne, %4, %5 : vector<1x256xi32>
    %c0_i32_1 = arith.constant 0 : i32
    %7 = vector.broadcast %c0_i32_1 : i32 to vector<1x256xi32>
    %8 = arith.cmpi slt, %4, %7 : vector<1x256xi32>
    %c0_i32_2 = arith.constant 0 : i32
    %9 = arith.cmpi slt, %2, %c0_i32_2 : i32
    %10 = vector.broadcast %9 : i1 to vector<1x256xi1>
    %11 = vector.broadcast %10 : vector<1x256xi1> to vector<1x256xi1>
    %12 = arith.xori %8, %11 : vector<1x256xi1>
    %13 = arith.andi %12, %6 : vector<1x256xi1>
    %14 = vector.broadcast %2 : i32 to vector<1x256xi32>
    %15 = arith.addi %4, %14 : vector<1x256xi32>
    %16 = arith.select %13, %15, %4 : vector<1x256xi1>, vector<1x256xi32>
    %c1_i32_3 = arith.constant 1 : i32
    %17 = vector.broadcast %c1_i32_3 : i32 to vector<1x256xi32>
    %18 = arith.cmpi sge, %16, %17 : vector<1x256xi32>
    %c14_i32 = arith.constant 14 : i32
    %19 = vector.broadcast %c14_i32 : i32 to vector<1x256xi32>
    %20 = arith.cmpi sle, %16, %19 : vector<1x256xi32>
    %cst = arith.constant 0.000000e+00 : f32
    %21 = vector.broadcast %cst : f32 to vector<8x512xf32>
    %c0 = arith.constant 0 : index
    %c0_4 = arith.constant 0 : index
    %22 = vector.load %arg9[%c0, %c0_4] : memref<8x512xf32, #tpu.memory_space<vmem>>, vector<8x512xf32>
    tpu.vector_store %arg9[%c0, %c0_4], %21 {strides = array<i32>} : memref<8x512xf32, #tpu.memory_space<vmem>>, vector<8x512xf32>,
    %c0_5 = arith.constant 0 : index
    %c0_6 = arith.constant 0 : index
    %c0_7 = arith.constant 0 : index
    %23 = vector.load %arg1[%c0_5, %c0_6, %c0_7] : memref<1x8x256xf32, #tpu.memory_space<vmem>>, vector<1x8x256xf32>
    %24 = vector.shape_cast %23 : vector<1x8x256xf32> to vector<8x256xf32>
    %c0_8 = arith.constant 0 : index
    %c128 = arith.constant 128 : index
    %25 = vector.load %arg9[%c0_8, %c128] : memref<8x512xf32, #tpu.memory_space<vmem>>, vector<8x256xf32>
    tpu.vector_store %arg9[%c0_8, %c128], %24 {strides = array<i32>} : memref<8x512xf32, #tpu.memory_space<vmem>>, vector<8x256xf32>,
    %c0_9 = arith.constant 0 : index
    %c111 = arith.constant 111 : index
    %26 = vector.load %arg9[%c0_9, %c111] : memref<8x512xf32, #tpu.memory_space<vmem>>, vector<8x256xf32>
    %cst_10 = arith.constant 0.000000e+00 : f32
    %27 = vector.shape_cast %18 : vector<1x256xi1> to vector<1x256xi1>
    %28 = vector.broadcast %27 : vector<1x256xi1> to vector<8x256xi1>
    %29 = vector.broadcast %cst_10 : f32 to vector<8x256xf32>
    %30 = arith.select %28, %26, %29 : vector<8x256xi1>, vector<8x256xf32>
    %c0_11 = arith.constant 0 : index
    %c112 = arith.constant 112 : index
    %31 = vector.load %arg9[%c0_11, %c112] : memref<8x512xf32, #tpu.memory_space<vmem>>, vector<8x256xf32>
    %c0_12 = arith.constant 0 : index
    %c113 = arith.constant 113 : index
    %32 = vector.load %arg9[%c0_12, %c113] : memref<8x512xf32, #tpu.memory_space<vmem>>, vector<8x256xf32>
    %cst_13 = arith.constant 0.000000e+00 : f32
    %33 = vector.shape_cast %20 : vector<1x256xi1> to vector<1x256xi1>
    %34 = vector.broadcast %33 : vector<1x256xi1> to vector<8x256xi1>
    %35 = vector.broadcast %cst_13 : f32 to vector<8x256xf32>
    %36 = arith.select %34, %32, %35 : vector<8x256xi1>, vector<8x256xf32>
    %c0_14 = arith.constant 0 : index
    %c127 = arith.constant 127 : index
    %37 = vector.load %arg9[%c0_14, %c127] : memref<8x512xf32, #tpu.memory_space<vmem>>, vector<8x256xf32>
    %cst_15 = arith.constant 0.000000e+00 : f32
    %38 = vector.shape_cast %18 : vector<1x256xi1> to vector<1x256xi1>
    %39 = vector.broadcast %38 : vector<1x256xi1> to vector<8x256xi1>
    %40 = vector.broadcast %cst_15 : f32 to vector<8x256xf32>
    %41 = arith.select %39, %37, %40 : vector<8x256xi1>, vector<8x256xf32>
    %c0_16 = arith.constant 0 : index
    %c128_17 = arith.constant 128 : index
    %42 = vector.load %arg9[%c0_16, %c128_17] : memref<8x512xf32, #tpu.memory_space<vmem>>, vector<8x256xf32>
    %c0_18 = arith.constant 0 : index
    %c129 = arith.constant 129 : index
    %43 = vector.load %arg9[%c0_18, %c129] : memref<8x512xf32, #tpu.memory_space<vmem>>, vector<8x256xf32>
    %cst_19 = arith.constant 0.000000e+00 : f32
    %44 = vector.shape_cast %20 : vector<1x256xi1> to vector<1x256xi1>
    %45 = vector.broadcast %44 : vector<1x256xi1> to vector<8x256xi1>
    %46 = vector.broadcast %cst_19 : f32 to vector<8x256xf32>
    %47 = arith.select %45, %43, %46 : vector<8x256xi1>, vector<8x256xf32>
    %c0_20 = arith.constant 0 : index
    %c143 = arith.constant 143 : index
    %48 = vector.load %arg9[%c0_20, %c143] : memref<8x512xf32, #tpu.memory_space<vmem>>, vector<8x256xf32>
    %cst_21 = arith.constant 0.000000e+00 : f32
    %49 = vector.shape_cast %18 : vector<1x256xi1> to vector<1x256xi1>
    %50 = vector.broadcast %49 : vector<1x256xi1> to vector<8x256xi1>
    %51 = vector.broadcast %cst_21 : f32 to vector<8x256xf32>
    %52 = arith.select %50, %48, %51 : vector<8x256xi1>, vector<8x256xf32>
    %c0_22 = arith.constant 0 : index
    %c144 = arith.constant 144 : index
    %53 = vector.load %arg9[%c0_22, %c144] : memref<8x512xf32, #tpu.memory_space<vmem>>, vector<8x256xf32>
    %c0_23 = arith.constant 0 : index
    %c145 = arith.constant 145 : index
    %54 = vector.load %arg9[%c0_23, %c145] : memref<8x512xf32, #tpu.memory_space<vmem>>, vector<8x256xf32>
    %cst_24 = arith.constant 0.000000e+00 : f32
    %55 = vector.shape_cast %20 : vector<1x256xi1> to vector<1x256xi1>
    %56 = vector.broadcast %55 : vector<1x256xi1> to vector<8x256xi1>
    %57 = vector.broadcast %cst_24 : f32 to vector<8x256xf32>
    %58 = arith.select %56, %54, %57 : vector<8x256xi1>, vector<8x256xf32>
    %c0_25 = arith.constant 0 : index
    %c0_26 = arith.constant 0 : index
    %59 = vector.load %arg2[%c0_25, %c0_26] : memref<8x72xbf16, #tpu.memory_space<vmem>>, vector<8x72xbf16>
    %60 = tpu.concatenate %30, %31, %36, %41, %42, %47, %52, %53, %58 in 0 : vector<8x256xf32>, vector<8x256xf32>, vector<8x256xf32>, vector<8x256xf32>, vector<8x256xf32>, vector<8x256xf32>, vector<8x256xf32>, vector<8x256xf32>, vector<8x256xf32> -> vector<72x256xf32>
    %61 = arith.truncf %60 : vector<72x256xf32> to vector<72x256xbf16>
    %cst_27 = arith.constant dense<0.000000e+00> : vector<8x256xf32>
    %62 = tpu.matmul %59, %61, %cst_27 {dimension_numbers = #tpu.dot_dimension_numbers<[1], [0], [0], [1], [0, 0, 1, 1], [], []>} : vector<8x72xbf16>, vector<72x256xbf16>, vector<8x256xf32> -> vector<8x256xf32>
    %c0_28 = arith.constant 0 : index
    %c0_29 = arith.constant 0 : index
    %63 = vector.load %arg3[%c0_28, %c0_29] : memref<8x1xf32, #tpu.memory_space<vmem>>, vector<8x1xf32>
    %64 = vector.broadcast %63 : vector<8x1xf32> to vector<8x256xf32>
    %65 = arith.addf %62, %64 : vector<8x256xf32>
    %cst_30 = arith.constant 0.000000e+00 : f32
    %66 = vector.broadcast %cst_30 : f32 to vector<8x256xf32>
    %67 = arith.maximumf %65, %66 : vector<8x256xf32>
    %c0_31 = arith.constant 0 : index
    %c128_32 = arith.constant 128 : index
    %68 = vector.load %arg9[%c0_31, %c128_32] : memref<8x512xf32, #tpu.memory_space<vmem>>, vector<8x256xf32>
    tpu.vector_store %arg9[%c0_31, %c128_32], %67 {strides = array<i32>} : memref<8x512xf32, #tpu.memory_space<vmem>>, vector<8x256xf32>,
    %c0_33 = arith.constant 0 : index
    %c111_34 = arith.constant 111 : index
    %69 = vector.load %arg9[%c0_33, %c111_34] : memref<8x512xf32, #tpu.memory_space<vmem>>, vector<8x256xf32>
    %cst_35 = arith.constant 0.000000e+00 : f32
    %70 = vector.shape_cast %18 : vector<1x256xi1> to vector<1x256xi1>
    %71 = vector.broadcast %70 : vector<1x256xi1> to vector<8x256xi1>
    %72 = vector.broadcast %cst_35 : f32 to vector<8x256xf32>
    %73 = arith.select %71, %69, %72 : vector<8x256xi1>, vector<8x256xf32>
    %c0_36 = arith.constant 0 : index
    %c112_37 = arith.constant 112 : index
    %74 = vector.load %arg9[%c0_36, %c112_37] : memref<8x512xf32, #tpu.memory_space<vmem>>, vector<8x256xf32>
    %c0_38 = arith.constant 0 : index
    %c113_39 = arith.constant 113 : index
    %75 = vector.load %arg9[%c0_38, %c113_39] : memref<8x512xf32, #tpu.memory_space<vmem>>, vector<8x256xf32>
    %cst_40 = arith.constant 0.000000e+00 : f32
    %76 = vector.shape_cast %20 : vector<1x256xi1> to vector<1x256xi1>
    %77 = vector.broadcast %76 : vector<1x256xi1> to vector<8x256xi1>
    %78 = vector.broadcast %cst_40 : f32 to vector<8x256xf32>
    %79 = arith.select %77, %75, %78 : vector<8x256xi1>, vector<8x256xf32>
    %c0_41 = arith.constant 0 : index
    %c127_42 = arith.constant 127 : index
    %80 = vector.load %arg9[%c0_41, %c127_42] : memref<8x512xf32, #tpu.memory_space<vmem>>, vector<8x256xf32>
    %cst_43 = arith.constant 0.000000e+00 : f32
    %81 = vector.shape_cast %18 : vector<1x256xi1> to vector<1x256xi1>
    %82 = vector.broadcast %81 : vector<1x256xi1> to vector<8x256xi1>
    %83 = vector.broadcast %cst_43 : f32 to vector<8x256xf32>
    %84 = arith.select %82, %80, %83 : vector<8x256xi1>, vector<8x256xf32>
    %c0_44 = arith.constant 0 : index
    %c128_45 = arith.constant 128 : index
    %85 = vector.load %arg9[%c0_44, %c128_45] : memref<8x512xf32, #tpu.memory_space<vmem>>, vector<8x256xf32>
    %c0_46 = arith.constant 0 : index
    %c129_47 = arith.constant 129 : index
    %86 = vector.load %arg9[%c0_46, %c129_47] : memref<8x512xf32, #tpu.memory_space<vmem>>, vector<8x256xf32>
    %cst_48 = arith.constant 0.000000e+00 : f32
    %87 = vector.shape_cast %20 : vector<1x256xi1> to vector<1x256xi1>
    %88 = vector.broadcast %87 : vector<1x256xi1> to vector<8x256xi1>
    %89 = vector.broadcast %cst_48 : f32 to vector<8x256xf32>
    %90 = arith.select %88, %86, %89 : vector<8x256xi1>, vector<8x256xf32>
    %c0_49 = arith.constant 0 : index
    %c143_50 = arith.constant 143 : index
    %91 = vector.load %arg9[%c0_49, %c143_50] : memref<8x512xf32, #tpu.memory_space<vmem>>, vector<8x256xf32>
    %cst_51 = arith.constant 0.000000e+00 : f32
    %92 = vector.shape_cast %18 : vector<1x256xi1> to vector<1x256xi1>
    %93 = vector.broadcast %92 : vector<1x256xi1> to vector<8x256xi1>
    %94 = vector.broadcast %cst_51 : f32 to vector<8x256xf32>
    %95 = arith.select %93, %91, %94 : vector<8x256xi1>, vector<8x256xf32>
    %c0_52 = arith.constant 0 : index
    %c144_53 = arith.constant 144 : index
    %96 = vector.load %arg9[%c0_52, %c144_53] : memref<8x512xf32, #tpu.memory_space<vmem>>, vector<8x256xf32>
    %c0_54 = arith.constant 0 : index
    %c145_55 = arith.constant 145 : index
    %97 = vector.load %arg9[%c0_54, %c145_55] : memref<8x512xf32, #tpu.memory_space<vmem>>, vector<8x256xf32>
    %cst_56 = arith.constant 0.000000e+00 : f32
    %98 = vector.shape_cast %20 : vector<1x256xi1> to vector<1x256xi1>
    %99 = vector.broadcast %98 : vector<1x256xi1> to vector<8x256xi1>
    %100 = vector.broadcast %cst_56 : f32 to vector<8x256xf32>
    %101 = arith.select %99, %97, %100 : vector<8x256xi1>, vector<8x256xf32>
    %c0_57 = arith.constant 0 : index
    %c0_58 = arith.constant 0 : index
    %102 = vector.load %arg4[%c0_57, %c0_58] : memref<8x72xbf16, #tpu.memory_space<vmem>>, vector<8x72xbf16>
    %103 = tpu.concatenate %73, %74, %79, %84, %85, %90, %95, %96, %101 in 0 : vector<8x256xf32>, vector<8x256xf32>, vector<8x256xf32>, vector<8x256xf32>, vector<8x256xf32>, vector<8x256xf32>, vector<8x256xf32>, vector<8x256xf32>, vector<8x256xf32> -> vector<72x256xf32>
    %104 = arith.truncf %103 : vector<72x256xf32> to vector<72x256xbf16>
    %cst_59 = arith.constant dense<0.000000e+00> : vector<8x256xf32>
    %105 = tpu.matmul %102, %104, %cst_59 {dimension_numbers = #tpu.dot_dimension_numbers<[1], [0], [0], [1], [0, 0, 1, 1], [], []>} : vector<8x72xbf16>, vector<72x256xbf16>, vector<8x256xf32> -> vector<8x256xf32>
    %c0_60 = arith.constant 0 : index
    %c0_61 = arith.constant 0 : index
    %106 = vector.load %arg5[%c0_60, %c0_61] : memref<8x1xf32, #tpu.memory_space<vmem>>, vector<8x1xf32>
    %107 = vector.broadcast %106 : vector<8x1xf32> to vector<8x256xf32>
    %108 = arith.addf %105, %107 : vector<8x256xf32>
    %cst_62 = arith.constant 0.000000e+00 : f32
    %109 = vector.broadcast %cst_62 : f32 to vector<8x256xf32>
    %110 = arith.maximumf %108, %109 : vector<8x256xf32>
    %c0_63 = arith.constant 0 : index
    %c0_64 = arith.constant 0 : index
    %111 = vector.load %arg6[%c0_63, %c0_64] : memref<16x8xbf16, #tpu.memory_space<vmem>>, vector<16x8xbf16>
    %112 = arith.truncf %110 : vector<8x256xf32> to vector<8x256xbf16>
    %cst_65 = arith.constant dense<0.000000e+00> : vector<16x256xf32>
    %113 = tpu.matmul %111, %112, %cst_65 {dimension_numbers = #tpu.dot_dimension_numbers<[1], [0], [0], [1], [0, 0, 1, 1], [], []>} : vector<16x8xbf16>, vector<8x256xbf16>, vector<16x256xf32> -> vector<16x256xf32>
    %c0_66 = arith.constant 0 : index
    %c0_67 = arith.constant 0 : index
    %114 = vector.load %arg7[%c0_66, %c0_67] : memref<16x1xf32, #tpu.memory_space<vmem>>, vector<16x1xf32>
    %115 = vector.broadcast %114 : vector<16x1xf32> to vector<16x256xf32>
    %116 = arith.addf %113, %115 : vector<16x256xf32>
    %cst_68 = arith.constant 0.000000e+00 : f32
    %117 = vector.broadcast %cst_68 : f32 to vector<16x256xf32>
    %118 = arith.maximumf %116, %117 : vector<16x256xf32>
    %c0_69 = arith.constant 0 : index
    %c0_70 = arith.constant 0 : index
    %c0_71 = arith.constant 0 : index
    %119 = vector.load %arg8[%c0_69, %c0_70, %c0_71] : memref<1x16x256xf32, #tpu.memory_space<vmem>>, vector<1x16x256xf32>
    %120 = vector.shape_cast %119 : vector<1x16x256xf32> to vector<16x256xf32>
    %121 = vector.shape_cast %118 : vector<16x256xf32> to vector<1x16x256xf32>
    tpu.vector_store %arg8[%c0_69, %c0_70, %c0_71], %121 {strides = array<i32>} : memref<1x16x256xf32, #tpu.memory_space<vmem>>, vector<1x16x256xf32>,
    return
  }
  func.func @transform_0(%arg0: i32) -> (i32, i32, i32) {
    %c0_i32 = arith.constant 0 : i32
    %c0_i32_0 = arith.constant 0 : i32
    %c0_i32_1 = arith.constant 0 : i32
    return %arg0, %c0_i32, %c0_i32_0 : i32, i32, i32
  }
  func.func @transform_1(%arg0: i32) -> (i32, i32) {
    %c0_i32 = arith.constant 0 : i32
    %c0_i32_0 = arith.constant 0 : i32
    %c0_i32_1 = arith.constant 0 : i32
    return %c0_i32, %c0_i32_0 : i32, i32
  }
  func.func @transform_2(%arg0: i32) -> (i32, i32) {
    %c0_i32 = arith.constant 0 : i32
    %c0_i32_0 = arith.constant 0 : i32
    %c0_i32_1 = arith.constant 0 : i32
    return %c0_i32, %c0_i32_0 : i32, i32
  }
  func.func @transform_3(%arg0: i32) -> (i32, i32) {
    %c0_i32 = arith.constant 0 : i32
    %c0_i32_0 = arith.constant 0 : i32
    %c0_i32_1 = arith.constant 0 : i32
    return %c0_i32, %c0_i32_0 : i32, i32
  }
  func.func @transform_4(%arg0: i32) -> (i32, i32) {
    %c0_i32 = arith.constant 0 : i32
    %c0_i32_0 = arith.constant 0 : i32
    %c0_i32_1 = arith.constant 0 : i32
    return %c0_i32, %c0_i32_0 : i32, i32
  }
  func.func @transform_5(%arg0: i32) -> (i32, i32) {
    %c0_i32 = arith.constant 0 : i32
    %c0_i32_0 = arith.constant 0 : i32
    %c0_i32_1 = arith.constant 0 : i32
    return %c0_i32, %c0_i32_0 : i32, i32
  }
  func.func @transform_6(%arg0: i32) -> (i32, i32) {
    %c0_i32 = arith.constant 0 : i32
    %c0_i32_0 = arith.constant 0 : i32
    %c0_i32_1 = arith.constant 0 : i32
    return %c0_i32, %c0_i32_0 : i32, i32
  }
  func.func @transform_7(%arg0: i32) -> (i32, i32, i32) {
    %c0_i32 = arith.constant 0 : i32
    %c0_i32_0 = arith.constant 0 : i32
    %c0_i32_1 = arith.constant 0 : i32
    return %arg0, %c0_i32, %c0_i32_0 : i32, i32, i32
  }
}

</mosaic_0001>

<llo_original>
// kernel: tpu_custom_call.1
$region0: #{tpu_custom_call.1}
  #allocation0 [shape = 'u32[]', space=smem, size = 0x4, offset = 0x4, fixed_abs, tag = 'smem constant byte address 0x4 - core index']
  #allocation1 [shape = 'u32[144,128]{1,0:T(1,128)}', space=vmem, size = 0x12000, scoped, tag = 'internal scratch']
  #allocation2 [shape = 'f32[8,512]{1,0:T(8,128)}', space=vmem, size = 0x4000, scoped, tag = 'scratch operand']
  %s0 = inlined_call_operand.vmem [shape: f32[2,8,256], index: 0, kind: input, shape index: {}]
  %s1 = inlined_call_operand.vmem [shape: bf16[8,72], index: 1, kind: input, shape index: {}]
  %s2 = inlined_call_operand.vmem [shape: f32[8,1], index: 2, kind: input, shape index: {}]
  %s3 = inlined_call_operand.vmem [shape: bf16[8,72], index: 3, kind: input, shape index: {}]
  %s4 = inlined_call_operand.vmem [shape: f32[8,1], index: 4, kind: input, shape index: {}]
  %s5 = inlined_call_operand.vmem [shape: bf16[16,8], index: 5, kind: input, shape index: {}]
  %s6 = inlined_call_operand.vmem [shape: f32[16,1], index: 6, kind: input, shape index: {}]
  %s7 = inlined_call_operand.hbm [shape: f32[2,16,256], index: 7, kind: output, shape index: {}]
  %s8 = sld [smem:[#allocation0]]
  $region61: #{tpu_custom_call.1} parent=0
    _
  %s10 = ssub.s32 1, %s8
  %s11 = scalar_select 0, %s10, %s8
  $region1: #{tpu_custom_call.1} parent=0
    #allocation3 [shape = 'u8[32768]{0}', space=vmem, size = 0x8000, scoped, tag = 'output window, operand 0']
    #allocation4 [shape = 's32[2]{0}', space=sflag, size = 0x8, scoped, tag = 'scoped memory for tpu_custom_call.1']
    %12 = vsyncpa [#allocation4], 0
    %s13 = scalar_lea.sflag [#allocation4], 1
    %14 = vsyncpa %s13, 0
    loop: start=0, step=1, limit=4
    $region2: #{tpu_custom_call.1} parent=1 // loop_pre_header
      _
    $region3: #{tpu_custom_call.1} parent=1 // loop_header
      %s16 = sphi 0, %s20
      %p17 = scmp.ge.s32.totalorder %s16, 4
      %s26 = sphi 0, %s28
      %s29 = sphi 0, %s26
      %s30 = sphi 0, %s29
      %s46 = sphi 0, %s30
      %s50 = sphi 0, %s50
      %s52 = sphi 0, %s50
      %s53 = sphi 0, %s52
      %s67 = sphi 0, %s53
      %s71 = sphi 0, %s71
      %s73 = sphi 0, %s71
      %s74 = sphi 0, %s73
      %s88 = sphi 0, %s74
      %s92 = sphi 0, %s92
      %s94 = sphi 0, %s92
      %s95 = sphi 0, %s94
      %s109 = sphi 0, %s95
      %s113 = sphi 0, %s113
      %s115 = sphi 0, %s113
      %s116 = sphi 0, %s115
      %s130 = sphi 0, %s116
      %s134 = sphi 0, %s134
      %s136 = sphi 0, %s134
      %s137 = sphi 0, %s136
      %s151 = sphi 0, %s137
      %s155 = sphi 0, %s155
      %s157 = sphi 0, %s155
      %s158 = sphi 0, %s157
      %s172 = sphi 0, %s158
      %s178 = sphi 0, %s180
      %s181 = sphi 0, %s178
      %s182 = sphi 0, %s181
      %s198 = sphi 0, %s182
    $region4: #{tpu_custom_call.1} parent=1 // loop_header_branch
      %19 = sbr.rel (%p17) target = $region8
    $region5: #{tpu_custom_call.1} parent=1 // loop_body
      %s21 = ssub.s32 %s16, 1
      %s22 = ssub.s32 %s16, 2
      %s23 = sadd.s32 %s16, 1
      %s24 = ssub.s32 %s16, %s23
      %p25 = scmp.eq.s32.totalorder %s24, 0
      %s27 = sadd.s32 %s26, 1
      %s28 = scalar_select %p25, %s26, %s27
      %p31 = pneg %p25
      %p32 = scmp.eq.s32.totalorder %s16, 1
      %p33 = por %p31, %p32
      %p34 = scmp.ne.s32.totalorder %s26, %s29
      %p35 = scmp.eq.s32.totalorder %s16, 0
      %p36 = por %p34, %p35
      %p37 = scmp.ne.s32.totalorder %s26, %s29
      %p38 = scmp.eq.s32.totalorder %s21, 1
      %p39 = por %p37, %p38
      %p40 = scmp.ne.s32.totalorder %s29, %s30
      %p41 = scmp.eq.s32.totalorder %s21, 0
      %p42 = por %p40, %p41
      %p43 = scmp.ne.s32.totalorder %s29, %s30
      %p44 = scmp.eq.s32.totalorder %s22, 1
      %p45 = por %p43, %p44
      %p47 = scmp.ne.s32.totalorder %s30, %s46
      %p48 = scmp.eq.s32.totalorder %s22, 0
      %p49 = por %p47, %p48
      %s51 = sadd.s32 %s50, 1
      %p54 = scmp.eq.s32.totalorder %s16, 1
      %p55 = scmp.ne.s32.totalorder %s50, %s52
      %p56 = scmp.eq.s32.totalorder %s16, 0
      %p57 = por %p55, %p56
      %p58 = scmp.ne.s32.totalorder %s50, %s52
      %p59 = scmp.eq.s32.totalorder %s21, 1
      %p60 = por %p58, %p59
      %p61 = scmp.ne.s32.totalorder %s52, %s53
      %p62 = scmp.eq.s32.totalorder %s21, 0
      %p63 = por %p61, %p62
      %p64 = scmp.ne.s32.totalorder %s52, %s53
      %p65 = scmp.eq.s32.totalorder %s22, 1
      %p66 = por %p64, %p65
      %p68 = scmp.ne.s32.totalorder %s53, %s67
      %p69 = scmp.eq.s32.totalorder %s22, 0
      %p70 = por %p68, %p69
      %s72 = sadd.s32 %s71, 1
      %p75 = scmp.eq.s32.totalorder %s16, 1
      %p76 = scmp.ne.s32.totalorder %s71, %s73
      %p77 = scmp.eq.s32.totalorder %s16, 0
      %p78 = por %p76, %p77
      %p79 = scmp.ne.s32.totalorder %s71, %s73
      %p80 = scmp.eq.s32.totalorder %s21, 1
      %p81 = por %p79, %p80
      %p82 = scmp.ne.s32.totalorder %s73, %s74
      %p83 = scmp.eq.s32.totalorder %s21, 0
      %p84 = por %p82, %p83
      %p85 = scmp.ne.s32.totalorder %s73, %s74
      %p86 = scmp.eq.s32.totalorder %s22, 1
      %p87 = por %p85, %p86
      %p89 = scmp.ne.s32.totalorder %s74, %s88
      %p90 = scmp.eq.s32.totalorder %s22, 0
      %p91 = por %p89, %p90
      %s93 = sadd.s32 %s92, 1
      %p96 = scmp.eq.s32.totalorder %s16, 1
      %p97 = scmp.ne.s32.totalorder %s92, %s94
      %p98 = scmp.eq.s32.totalorder %s16, 0
      %p99 = por %p97, %p98
      %p100 = scmp.ne.s32.totalorder %s92, %s94
      %p101 = scmp.eq.s32.totalorder %s21, 1
      %p102 = por %p100, %p101
      %p103 = scmp.ne.s32.totalorder %s94, %s95
      %p104 = scmp.eq.s32.totalorder %s21, 0
      %p105 = por %p103, %p104
      %p106 = scmp.ne.s32.totalorder %s94, %s95
      %p107 = scmp.eq.s32.totalorder %s22, 1
      %p108 = por %p106, %p107
      %p110 = scmp.ne.s32.totalorder %s95, %s109
      %p111 = scmp.eq.s32.totalorder %s22, 0
      %p112 = por %p110, %p111
      %s114 = sadd.s32 %s113, 1
      %p117 = scmp.eq.s32.totalorder %s16, 1
      %p118 = scmp.ne.s32.totalorder %s113, %s115
      %p119 = scmp.eq.s32.totalorder %s16, 0
      %p120 = por %p118, %p119
      %p121 = scmp.ne.s32.totalorder %s113, %s115
      %p122 = scmp.eq.s32.totalorder %s21, 1
      %p123 = por %p121, %p122
      %p124 = scmp.ne.s32.totalorder %s115, %s116
      %p125 = scmp.eq.s32.totalorder %s21, 0
      %p126 = por %p124, %p125
      %p127 = scmp.ne.s32.totalorder %s115, %s116
      %p128 = scmp.eq.s32.totalorder %s22, 1
      %p129 = por %p127, %p128
      %p131 = scmp.ne.s32.totalorder %s116, %s130
      %p132 = scmp.eq.s32.totalorder %s22, 0
      %p133 = por %p131, %p132
      %s135 = sadd.s32 %s134, 1
      %p138 = scmp.eq.s32.totalorder %s16, 1
      %p139 = scmp.ne.s32.totalorder %s134, %s136
      %p140 = scmp.eq.s32.totalorder %s16, 0
      %p141 = por %p139, %p140
      %p142 = scmp.ne.s32.totalorder %s134, %s136
      %p143 = scmp.eq.s32.totalorder %s21, 1
      %p144 = por %p142, %p143
      %p145 = scmp.ne.s32.totalorder %s136, %s137
      %p146 = scmp.eq.s32.totalorder %s21, 0
      %p147 = por %p145, %p146
      %p148 = scmp.ne.s32.totalorder %s136, %s137
      %p149 = scmp.eq.s32.totalorder %s22, 1
      %p150 = por %p148, %p149
      %p152 = scmp.ne.s32.totalorder %s137, %s151
      %p153 = scmp.eq.s32.totalorder %s22, 0
      %p154 = por %p152, %p153
      %s156 = sadd.s32 %s155, 1
      %p159 = scmp.eq.s32.totalorder %s16, 1
      %p160 = scmp.ne.s32.totalorder %s155, %s157
      %p161 = scmp.eq.s32.totalorder %s16, 0
      %p162 = por %p160, %p161
      %p163 = scmp.ne.s32.totalorder %s155, %s157
      %p164 = scmp.eq.s32.totalorder %s21, 1
      %p165 = por %p163, %p164
      %p166 = scmp.ne.s32.totalorder %s157, %s158
      %p167 = scmp.eq.s32.totalorder %s21, 0
      %p168 = por %p166, %p167
      %p169 = scmp.ne.s32.totalorder %s157, %s158
      %p170 = scmp.eq.s32.totalorder %s22, 1
      %p171 = por %p169, %p170
      %p173 = scmp.ne.s32.totalorder %s158, %s172
      %p174 = scmp.eq.s32.totalorder %s22, 0
      %p175 = por %p173, %p174
      %s176 = ssub.s32 %s16, %s23
      %p177 = scmp.eq.s32.totalorder %s176, 0
      %s179 = sadd.s32 %s178, 1
      %s180 = scalar_select %p177, %s178, %s179
      %p183 = pneg %p177
      %p184 = scmp.eq.s32.totalorder %s16, 1
      %p185 = por %p183, %p184
      %p186 = scmp.ne.s32.totalorder %s178, %s181
      %p187 = scmp.eq.s32.totalorder %s16, 0
      %p188 = por %p186, %p187
      %p189 = scmp.ne.s32.totalorder %s178, %s181
      %p190 = scmp.eq.s32.totalorder %s21, 1
      %p191 = por %p189, %p190
      %p192 = scmp.ne.s32.totalorder %s181, %s182
      %p193 = scmp.eq.s32.totalorder %s21, 0
      %p194 = por %p192, %p193
      %p195 = scmp.ne.s32.totalorder %s181, %s182
      %p196 = scmp.eq.s32.totalorder %s22, 1
      %p197 = por %p195, %p196
      %p199 = scmp.ne.s32.totalorder %s182, %s198
      %p200 = scmp.eq.s32.totalorder %s22, 0
      %p201 = por %p199, %p200
      %p202 = scmp.le.s32.totalorder 1, %s16
      %p203 = scmp.lt.s32.totalorder %s16, 3
      %p204 = pnand %p202, %p203
      %p205 = pneg %p204
      // Predicated region
      $region9: #{tpu_custom_call.1} parent=5 // pred_check
        _
      $region10: #{tpu_custom_call.1} parent=5 // pred_check_branch
        %207 = sbr.rel (%p204) target = $region12
      $region11: #{tpu_custom_call.1} parent=5 // pred_region
        %s208 = ssub.s32 %s16, 1
        // Predicated region
        $region13: #{tpu_custom_call.1} parent=11 // pred_check
          %p209 = pneg %p63
        $region14: #{tpu_custom_call.1} parent=11 // pred_check_branch
          %211 = sbr.rel (%p209) target = $region16
        $region15: #{tpu_custom_call.1} parent=11 // pred_region
          _
        $region16: #{tpu_custom_call.1} parent=11 // pred_fallthru
          _
        // Predicated region
        $region17: #{tpu_custom_call.1} parent=11 // pred_check
          %p212 = pneg %p84
        $region18: #{tpu_custom_call.1} parent=11 // pred_check_branch
          %214 = sbr.rel (%p212) target = $region20
        $region19: #{tpu_custom_call.1} parent=11 // pred_region
          _
        $region20: #{tpu_custom_call.1} parent=11 // pred_fallthru
          _
        // Predicated region
        $region21: #{tpu_custom_call.1} parent=11 // pred_check
          %p215 = pneg %p105
        $region22: #{tpu_custom_call.1} parent=11 // pred_check_branch
          %217 = sbr.rel (%p215) target = $region24
        $region23: #{tpu_custom_call.1} parent=11 // pred_region
          _
        $region24: #{tpu_custom_call.1} parent=11 // pred_fallthru
          _
        // Predicated region
        $region25: #{tpu_custom_call.1} parent=11 // pred_check
          %p218 = pneg %p126
        $region26: #{tpu_custom_call.1} parent=11 // pred_check_branch
          %220 = sbr.rel (%p218) target = $region28
        $region27: #{tpu_custom_call.1} parent=11 // pred_region
          _
        $region28: #{tpu_custom_call.1} parent=11 // pred_fallthru
          _
        // Predicated region
        $region29: #{tpu_custom_call.1} parent=11 // pred_check
          %p221 = pneg %p147
        $region30: #{tpu_custom_call.1} parent=11 // pred_check_branch
          %223 = sbr.rel (%p221) target = $region32
        $region31: #{tpu_custom_call.1} parent=11 // pred_region
          _
        $region32: #{tpu_custom_call.1} parent=11 // pred_fallthru
          _
        // Predicated region
        $region33: #{tpu_custom_call.1} parent=11 // pred_check
          %p224 = pneg %p168
        $region34: #{tpu_custom_call.1} parent=11 // pred_check_branch
          %226 = sbr.rel (%p224) target = $region36
        $region35: #{tpu_custom_call.1} parent=11 // pred_region
          _
        $region36: #{tpu_custom_call.1} parent=11 // pred_fallthru
          _
      $region12: #{tpu_custom_call.1} parent=5 // pred_fallthru
        _
      %p227 = scmp.lt.s32.totalorder %s16, 2
      // Predicated region
      $region37: #{tpu_custom_call.1} parent=5 // pred_check
        %p228 = pneg %p227
      $region38: #{tpu_custom_call.1} parent=5 // pred_check_branch
        %230 = sbr.rel (%p228) target = $region40
      $region39: #{tpu_custom_call.1} parent=5 // pred_region
        // Predicated region
        $region41: #{tpu_custom_call.1} parent=39 // pred_check
          %p231 = pneg %p36
        $region42: #{tpu_custom_call.1} parent=39 // pred_check_branch
          %233 = sbr.rel (%p231) target = $region44
        $region43: #{tpu_custom_call.1} parent=39 // pred_region
          %p234 = scmp.lt.s32.totalorder %s16, 1
          %s235 = scalar_select %p234, %s16, 1
          %s236 = smul.addr %s235, 2
          %s237 = smul.addr %s236, 8
          %s238 = scalar_lea.vmem %s0, %s237
        $region44: #{tpu_custom_call.1} parent=39 // pred_fallthru
          _
      $region40: #{tpu_custom_call.1} parent=5 // pred_fallthru
        _
      %p239 = scmp.le.s32.totalorder 1, %s16
      %p240 = scmp.lt.s32.totalorder %s16, 3
      %p241 = pnand %p239, %p240
      %p242 = pneg %p241
      // Predicated region
      $region45: #{tpu_custom_call.1} parent=5 // pred_check
        _
      $region46: #{tpu_custom_call.1} parent=5 // pred_check_branch
        %244 = sbr.rel (%p241) target = $region48
      $region47: #{tpu_custom_call.1} parent=5 // pred_region
        %s245 = ssub.s32 %s16, 1
        %p246 = scmp.lt.s32.totalorder %s21, 1
        %s247 = scalar_select %p246, %s21, 1
        %s248 = smul.addr %s247, 2
        %s249 = smul.addr %s248, 8
        %s250 = scalar_lea.vmem %s0, %s249
        %p251 = pneg %p42
        %p252 = pneg %p39
        %p253 = pneg %p63
        %p254 = pneg %p60
        %p255 = pneg %p84
        %p256 = pneg %p81
        %p257 = pneg %p105
        %p258 = pneg %p102
        %p259 = pneg %p126
        %p260 = pneg %p123
        %p261 = pneg %p147
        %p262 = pneg %p144
        %p263 = pneg %p168
        %p264 = pneg %p165
        %p265 = pneg %p194
        %p266 = pneg %p191
        %s267 = sand.u32 %s181, 1
        %s268 = scalar_lea.sflag [#allocation4], %s267
        %s269 = sand.u32 %s181, 1
        %s270 = smul.addr %s269, 32
        %s271 = scalar_lea.vmem [#allocation3], %s270
        %p272 = scmp.lt.s32.totalorder %s21, 1
        %s273 = scalar_select %p272, %s21, 1
        %s274 = smul.addr %s273, 2
        %s275 = smul.addr %s274, 8
        %s276 = scalar_lea.vmem %s0, %s275
        %v278 = vlaneseq
        %v279 = vand.u32 %v278, 127
        %v280 = vadd.s32 %v279, 128
        %vm281 = vcmp.lt.s32.totalorder %v279, 0
        %v282 = vsub.s32 0, %v279
        %v283 = vsel %vm281, %v282, %v279
        %v284 = vshrl.u32 %v283, 4
        %v285 = vand.u32 %v283, 15
        %v286 = vsub.s32 0, %v285
        %v287 = vsel %vm281, %v286, %v285
        %vm288 = vcmp.lt.s32.totalorder %v280, 0
        %v289 = vsub.s32 0, %v280
        %v290 = vsel %vm288, %v289, %v280
        %v291 = vshrl.u32 %v290, 4
        %v292 = vand.u32 %v290, 15
        %v293 = vsub.s32 0, %v292
        %v294 = vsel %vm288, %v293, %v292
        %vm295 = vcmp.ne.s32.totalorder %v287, 0
        %vm296 = vcmp.ne.s32.totalorder %v294, 0
        %vm297 = vcmp.lt.s32.totalorder %v287, 0
        %vm298 = vcmp.lt.s32.totalorder %v294, 0
        %vm299 = vmand %vm297, %vm295
        %vm300 = vmand %vm298, %vm296
        %v301 = vadd.s32 %v287, 16
        %v302 = vadd.s32 %v294, 16
        %v303 = vsel %vm299, %v301, %v287
        %v304 = vsel %vm300, %v302, %v294
        %vm305 = vcmp.ge.s32.totalorder %v303, 1
        %vm306 = vcmp.ge.s32.totalorder %v304, 1
        %vm307 = vcmp.le.s32.totalorder %v303, 14
        %vm308 = vcmp.le.s32.totalorder %v304, 14
        %309 = vst [vmem:[#allocation2] sm:$0xff] 0.0
        %310 = vst [vmem:[#allocation2 + $0x8] sm:$0xff] 0.0
        %311 = vst [vmem:[#allocation2 + $0x10] sm:$0xff] 0.0
        %312 = vst [vmem:[#allocation2 + $0x18] sm:$0xff] 0.0
        %v313 = vld [vmem:[%s276] sm:$0xff]
        %v314 = vld [vmem:[%s276 + $0x8] sm:$0xff]
        %315 = vst [vmem:[#allocation2 + $0x8] sm:$0xff] %v313
        %316 = vst [vmem:[#allocation2 + $0x10] sm:$0xff] %v314
        %v317 = vld [vmem:[#allocation2] sm:$0xff]
        %v318 = vld [vmem:[#allocation2 + $0x8] sm:$0xff]
        %v319 = vld [vmem:[#allocation2 + $0x10] sm:$0xff]
        %v320 = vsel %vm305, 1, 0
        %v321 = vsel %vm306, 1, 0
        %vm322 = vcmp.eq.s32.totalorder %v320, 1
        %vm323 = vcmp.eq.s32.totalorder %v321, 1
        %327 = vrot.lane.b32.xlu0 %v317, 17
        %v328 = vpop.permute.xlu0 %327
        %329 = vrot.lane.b32.xlu0 %v318, 17
        %v330 = vpop.permute.xlu0 %329
        %331 = vrot.lane.b32.xlu0 %v319, 17
        %v332 = vpop.permute.xlu0 %331
        %vm333 = vcmask 138240
        %v334 = vsel %vm333, %v328, %v330
        %v335 = vsel %vm333, %v330, %v332
        %v338 = vsel %vm322, %v334, 0.0
        %v339 = vsel %vm323, %v335, 0.0
        %v340 = vsel %vm307, 1, 0
        %v341 = vsel %vm308, 1, 0
        %vm342 = vcmp.eq.s32.totalorder %v340, 1
        %vm343 = vcmp.eq.s32.totalorder %v341, 1
        %344 = vrot.lane.b32.xlu0 %v317, 15
        %v345 = vpop.permute.xlu0 %344
        %346 = vrot.lane.b32.xlu0 %v318, 15
        %v347 = vpop.permute.xlu0 %346
        %348 = vrot.lane.b32.xlu0 %v319, 15
        %v349 = vpop.permute.xlu0 %348
        %vm350 = vcmask 121856
        %v351 = vsel %vm350, %v345, %v347
        %v352 = vsel %vm350, %v347, %v349
        %v355 = vsel %vm342, %v351, 0.0
        %v356 = vsel %vm343, %v352, 0.0
        %357 = vrot.lane.b32.xlu0 %v317, 1
        %v358 = vpop.permute.xlu0 %357
        %359 = vrot.lane.b32.xlu0 %v318, 1
        %v360 = vpop.permute.xlu0 %359
        %361 = vrot.lane.b32.xlu0 %v319, 1
        %v362 = vpop.permute.xlu0 %361
        %vm363 = vcmask 7168
        %v364 = vsel %vm363, %v358, %v360
        %v365 = vsel %vm363, %v360, %v362
        %v368 = vsel %vm322, %v364, 0.0
        %v369 = vsel %vm323, %v365, 0.0
        %v370 = vld [vmem:[#allocation2 + $0x8] sm:$0xff]
        %v371 = vld [vmem:[#allocation2 + $0x10] sm:$0xff]
        %v372 = vld [vmem:[#allocation2 + $0x18] sm:$0xff]
        %376 = vrot.lane.b32.xlu0 %v370, 127
        %v377 = vpop.permute.xlu0 %376
        %378 = vrot.lane.b32.xlu0 %v371, 127
        %v379 = vpop.permute.xlu0 %378
        %380 = vrot.lane.b32.xlu0 %v372, 127
        %v381 = vpop.permute.xlu0 %380
        %vm382 = vcmask 1039360
        %v383 = vsel %vm382, %v377, %v379
        %v384 = vsel %vm382, %v379, %v381
        %v387 = vsel %vm342, %v383, 0.0
        %v388 = vsel %vm343, %v384, 0.0
        %389 = vrot.lane.b32.xlu0 %v370, 113
        %v390 = vpop.permute.xlu0 %389
        %391 = vrot.lane.b32.xlu0 %v371, 113
        %v392 = vpop.permute.xlu0 %391
        %393 = vrot.lane.b32.xlu0 %v372, 113
        %v394 = vpop.permute.xlu0 %393
        %vm395 = vcmask 924672
        %v396 = vsel %vm395, %v390, %v392
        %v397 = vsel %vm395, %v392, %v394
        %v400 = vsel %vm322, %v396, 0.0
        %v401 = vsel %vm323, %v397, 0.0
        %402 = vrot.lane.b32.xlu0 %v370, 111
        %v403 = vpop.permute.xlu0 %402
        %404 = vrot.lane.b32.xlu0 %v371, 111
        %v405 = vpop.permute.xlu0 %404
        %406 = vrot.lane.b32.xlu0 %v372, 111
        %v407 = vpop.permute.xlu0 %406
        %vm408 = vcmask 908288
        %v409 = vsel %vm408, %v403, %v405
        %v410 = vsel %vm408, %v405, %v407
        %v413 = vsel %vm342, %v409, 0.0
        %v414 = vsel %vm343, %v410, 0.0
        %v415 = vld [vmem:[%s1] sm:$0xf]
        %416 = vrot.lane.b32.xlu0 %v317, 16
        %v417 = vpop.permute.xlu0 %416
        %418 = vrot.lane.b32.xlu0 %v318, 16
        %v419 = vpop.permute.xlu0 %418
        %420 = vrot.lane.b32.xlu0 %v319, 16
        %v421 = vpop.permute.xlu0 %420
        %vm422 = vcmask 130048
        %v423 = vsel %vm422, %v417, %v419
        %v424 = vsel %vm422, %v419, %v421
        %427 = vrot.lane.b32.xlu0 %v370, 112
        %v428 = vpop.permute.xlu0 %427
        %429 = vrot.lane.b32.xlu0 %v371, 112
        %v430 = vpop.permute.xlu0 %429
        %431 = vrot.lane.b32.xlu0 %v372, 112
        %v432 = vpop.permute.xlu0 %431
        %vm433 = vcmask 916480
        %v434 = vsel %vm433, %v428, %v430
        %v435 = vsel %vm433, %v430, %v432
        %v438 = vpack.c.bf16 %v423, %v338
        %v439 = vpack.c.bf16 %v424, %v339
        %v440 = vpack.c.bf16 %v368, %v355
        %v441 = vpack.c.bf16 %v369, %v356
        %v442 = vpack.c.bf16 %v387, %v318
        %v443 = vpack.c.bf16 %v388, %v319
        %v444 = vpack.c.bf16 %v434, %v400
        %v445 = vpack.c.bf16 %v435, %v401
        %v446 = vpack.c.bf16 %v413, %v413
        %v447 = vpack.c.bf16 %v414, %v414
        %v448 = vld [vmem:[%s2] sm:$0xff]
        %450 = vset.pattern.permute.xlu0 0
        %451 = vperm.xlu0 %450, %v448
        %v452 = vpop.permute.xlu0 %451
        %vm454 = vcmask 588800
        %v456 = vsel %vm454, %v415, 0
        %vm458 = vcmask 1043456
        %v460 = vsel %vm458, %v446, 0
        %v463 = vsel %vm458, %v447, 0
        %465 = vmatprep.subr.bf16.mxu0 %v439
        %466 = vmatpush1.bf16.msra.mxu0 %v438
        %467 = vmatprep.subr.bf16.mxu0 %v441
        %468 = vmatpush1.bf16.msra.mxu0 %v440
        %469 = vmatprep.subr.bf16.mxu0 %v443
        %470 = vmatpush1.bf16.msra.mxu0 %v442
        %471 = vmatprep.subr.bf16.mxu0 %v445
        %472 = vmatpush1.bf16.msra.mxu0 %v444
        %473 = vmatprep.subr.bf16.mxu0 %v463
        %474 = vmatpush1.bf16.msra.mxu0 %v460
        %475 = vmatprep.subr.bf16.mxu0 0
        %476 = vmatpush1.bf16.msra.mxu0 0
        %477 = vmatprep.subr.bf16.mxu0 0
        %478 = vmatpush1.bf16.msra.mxu0 0
        %479 = vmatprep.subr.bf16.mxu0 0
        %480 = vmatpush1.bf16.msra.mxu0 0
        %481 = vmatprep.subr.bf16.mxu0 0
        %482 = vmatpush1.bf16.msra.mxu0 0
        %483 = vmatprep.subr.bf16.mxu0 0
        %484 = vmatpush1.bf16.msra.mxu0 0
        %485 = vmatprep.subr.bf16.mxu0 0
        %486 = vmatpush1.bf16.msra.mxu0 0
        %487 = vmatprep.subr.bf16.mxu0 0
        %488 = vmatpush1.bf16.msra.mxu0 0
        %489 = vmatprep.subr.bf16.mxu0 0
        %490 = vmatpush1.bf16.msra.mxu0 0
        %491 = vmatprep.subr.bf16.mxu0 0
        %492 = vmatpush1.bf16.msra.mxu0 0
        %493 = vmatprep.subr.bf16.mxu0 0
        %494 = vmatpush1.bf16.msra.mxu0 0
        %495 = vmatprep.subr.bf16.mxu0 0
        %496 = vmatpush1.bf16.msra.mxu0 0
        %497 = vmatprep.mubr.bf16.mxu0 0
        %498 = vmatmul.mubr.bf16.gmra.mrb[0].mxu0 %v456
        %v499 = vpop.f32.mrb[0].mxu0
        %v500 = vadd.f32 %v452, %v499
        %v501 = vpop.f32.mrb[0].mxu0
        %v502 = vadd.f32 %v452, %v501
        %v503 = vpop.f32.mrb[0].mxu0
        %v504 = vpop.f32.mrb[0].mxu0
        %505 = vdwg.mxu0
        %v506 = vmax.f32 %v500, 0.0
        %v507 = vmax.f32 %v502, 0.0
        %508 = vst [vmem:[#allocation2 + $0x8] sm:$0xff] %v506
        %509 = vst [vmem:[#allocation2 + $0x10] sm:$0xff] %v507
        %v510 = vld [vmem:[#allocation2] sm:$0xff]
        %v511 = vld [vmem:[#allocation2 + $0x8] sm:$0xff]
        %v512 = vld [vmem:[#allocation2 + $0x10] sm:$0xff]
        %516 = vrot.lane.b32.xlu0 %v510, 17
        %v517 = vpop.permute.xlu0 %516
        %518 = vrot.lane.b32.xlu0 %v511, 17
        %v519 = vpop.permute.xlu0 %518
        %520 = vrot.lane.b32.xlu0 %v512, 17
        %v521 = vpop.permute.xlu0 %520
        %v522 = vsel %vm333, %v517, %v519
        %v523 = vsel %vm333, %v519, %v521
        %v526 = vsel %vm322, %v522, 0.0
        %v527 = vsel %vm323, %v523, 0.0
        %528 = vrot.lane.b32.xlu0 %v510, 15
        %v529 = vpop.permute.xlu0 %528
        %530 = vrot.lane.b32.xlu0 %v511, 15
        %v531 = vpop.permute.xlu0 %530
        %532 = vrot.lane.b32.xlu0 %v512, 15
        %v533 = vpop.permute.xlu0 %532
        %v534 = vsel %vm350, %v529, %v531
        %v535 = vsel %vm350, %v531, %v533
        %v538 = vsel %vm342, %v534, 0.0
        %v539 = vsel %vm343, %v535, 0.0
        %540 = vrot.lane.b32.xlu0 %v510, 1
        %v541 = vpop.permute.xlu0 %540
        %542 = vrot.lane.b32.xlu0 %v511, 1
        %v543 = vpop.permute.xlu0 %542
        %544 = vrot.lane.b32.xlu0 %v512, 1
        %v545 = vpop.permute.xlu0 %544
        %v546 = vsel %vm363, %v541, %v543
        %v547 = vsel %vm363, %v543, %v545
        %v550 = vsel %vm322, %v546, 0.0
        %v551 = vsel %vm323, %v547, 0.0
        %v552 = vld [vmem:[#allocation2 + $0x8] sm:$0xff]
        %v553 = vld [vmem:[#allocation2 + $0x10] sm:$0xff]
        %v554 = vld [vmem:[#allocation2 + $0x18] sm:$0xff]
        %558 = vrot.lane.b32.xlu0 %v552, 127
        %v559 = vpop.permute.xlu0 %558
        %560 = vrot.lane.b32.xlu0 %v553, 127
        %v561 = vpop.permute.xlu0 %560
        %562 = vrot.lane.b32.xlu0 %v554, 127
        %v563 = vpop.permute.xlu0 %562
        %v564 = vsel %vm382, %v559, %v561
        %v565 = vsel %vm382, %v561, %v563
        %v568 = vsel %vm342, %v564, 0.0
        %v569 = vsel %vm343, %v565, 0.0
        %570 = vrot.lane.b32.xlu0 %v552, 113
        %v571 = vpop.permute.xlu0 %570
        %572 = vrot.lane.b32.xlu0 %v553, 113
        %v573 = vpop.permute.xlu0 %572
        %574 = vrot.lane.b32.xlu0 %v554, 113
        %v575 = vpop.permute.xlu0 %574
        %v576 = vsel %vm395, %v571, %v573
        %v577 = vsel %vm395, %v573, %v575
        %v580 = vsel %vm322, %v576, 0.0
        %v581 = vsel %vm323, %v577, 0.0
        %582 = vrot.lane.b32.xlu0 %v552, 111
        %v583 = vpop.permute.xlu0 %582
        %584 = vrot.lane.b32.xlu0 %v553, 111
        %v585 = vpop.permute.xlu0 %584
        %586 = vrot.lane.b32.xlu0 %v554, 111
        %v587 = vpop.permute.xlu0 %586
        %v588 = vsel %vm408, %v583, %v585
        %v589 = vsel %vm408, %v585, %v587
        %v592 = vsel %vm342, %v588, 0.0
        %v593 = vsel %vm343, %v589, 0.0
        %v594 = vld [vmem:[%s3] sm:$0xf]
        %595 = vrot.lane.b32.xlu0 %v510, 16
        %v596 = vpop.permute.xlu0 %595
        %597 = vrot.lane.b32.xlu0 %v511, 16
        %v598 = vpop.permute.xlu0 %597
        %599 = vrot.lane.b32.xlu0 %v512, 16
        %v600 = vpop.permute.xlu0 %599
        %v601 = vsel %vm422, %v596, %v598
        %v602 = vsel %vm422, %v598, %v600
        %605 = vrot.lane.b32.xlu0 %v552, 112
        %v606 = vpop.permute.xlu0 %605
        %607 = vrot.lane.b32.xlu0 %v553, 112
        %v608 = vpop.permute.xlu0 %607
        %609 = vrot.lane.b32.xlu0 %v554, 112
        %v610 = vpop.permute.xlu0 %609
        %v611 = vsel %vm433, %v606, %v608
        %v612 = vsel %vm433, %v608, %v610
        %v615 = vpack.c.bf16 %v601, %v526
        %v616 = vpack.c.bf16 %v602, %v527
        %v617 = vpack.c.bf16 %v550, %v538
        %v618 = vpack.c.bf16 %v551, %v539
        %v619 = vpack.c.bf16 %v568, %v511
        %v620 = vpack.c.bf16 %v569, %v512
        %v621 = vpack.c.bf16 %v611, %v580
        %v622 = vpack.c.bf16 %v612, %v581
        %v623 = vpack.c.bf16 %v592, %v592
        %v624 = vpack.c.bf16 %v593, %v593
        %v625 = vld [vmem:[%s4] sm:$0xff]
        %627 = vset.pattern.permute.xlu0 0
        %628 = vperm.xlu0 %627, %v625
        %v629 = vpop.permute.xlu0 %628
        %v632 = vsel %vm454, %v594, 0
        %v635 = vsel %vm458, %v623, 0
        %v638 = vsel %vm458, %v624, 0
        %640 = vmatprep.subr.bf16.mxu0 %v616
        %641 = vmatpush1.bf16.msra.mxu0 %v615
        %642 = vmatprep.subr.bf16.mxu0 %v618
        %643 = vmatpush1.bf16.msra.mxu0 %v617
        %644 = vmatprep.subr.bf16.mxu0 %v620
        %645 = vmatpush1.bf16.msra.mxu0 %v619
        %646 = vmatprep.subr.bf16.mxu0 %v622
        %647 = vmatpush1.bf16.msra.mxu0 %v621
        %648 = vmatprep.subr.bf16.mxu0 %v638
        %649 = vmatpush1.bf16.msra.mxu0 %v635
        %650 = vmatprep.subr.bf16.mxu0 0
        %651 = vmatpush1.bf16.msra.mxu0 0
        %652 = vmatprep.subr.bf16.mxu0 0
        %653 = vmatpush1.bf16.msra.mxu0 0
        %654 = vmatprep.subr.bf16.mxu0 0
        %655 = vmatpush1.bf16.msra.mxu0 0
        %656 = vmatprep.subr.bf16.mxu0 0
        %657 = vmatpush1.bf16.msra.mxu0 0
        %658 = vmatprep.subr.bf16.mxu0 0
        %659 = vmatpush1.bf16.msra.mxu0 0
        %660 = vmatprep.subr.bf16.mxu0 0
        %661 = vmatpush1.bf16.msra.mxu0 0
        %662 = vmatprep.subr.bf16.mxu0 0
        %663 = vmatpush1.bf16.msra.mxu0 0
        %664 = vmatprep.subr.bf16.mxu0 0
        %665 = vmatpush1.bf16.msra.mxu0 0
        %666 = vmatprep.subr.bf16.mxu0 0
        %667 = vmatpush1.bf16.msra.mxu0 0
        %668 = vmatprep.subr.bf16.mxu0 0
        %669 = vmatpush1.bf16.msra.mxu0 0
        %670 = vmatprep.subr.bf16.mxu0 0
        %671 = vmatpush1.bf16.msra.mxu0 0
        %672 = vmatprep.mubr.bf16.mxu0 0
        %673 = vmatmul.mubr.bf16.gmra.mrb[0].mxu0 %v632
        %v674 = vpop.f32.mrb[0].mxu0
        %v675 = vadd.f32 %v629, %v674
        %v676 = vpop.f32.mrb[0].mxu0
        %v677 = vadd.f32 %v629, %v676
        %v678 = vpop.f32.mrb[0].mxu0
        %v679 = vpop.f32.mrb[0].mxu0
        %680 = vdwg.mxu0
        %v681 = vmax.f32 %v675, 0.0
        %v682 = vmax.f32 %v677, 0.0
        %v683 = vld [vmem:[%s5] sm:$0xf]
        %v684 = vld [vmem:[%s5 + $0x4] sm:$0xf]
        %v685 = vpack.c.bf16 %v681, %v681
        %v686 = vpack.c.bf16 %v682, %v682
        %v687 = vld [vmem:[%s6] sm:$0xff]
        %v688 = vld [vmem:[%s6 + $0x8] sm:$0xff]
        %690 = vset.pattern.permute.xlu0 0
        %691 = vperm.xlu0 %690, %v687
        %v692 = vpop.permute.xlu0 %691
        %695 = vset.pattern.permute.xlu0 0
        %696 = vperm.xlu0 %695, %v688
        %v697 = vpop.permute.xlu0 %696
        %v701 = vunpack.c.l.b16 %v683
        %v702 = vunpack.c.l.b16 %v684
        %v703 = vpack.c.b16 %v702, %v701
        %vm704 = vcmask 64512
        %v706 = vsel %vm704, %v703, 0
        %v709 = vsel %vm458, %v685, 0
        %v712 = vsel %vm458, %v686, 0
        %714 = vmatprep.subr.bf16.mxu0 %v712
        %715 = vmatpush1.bf16.msra.mxu0 %v709
        %716 = vmatprep.subr.bf16.mxu0 0
        %717 = vmatpush1.bf16.msra.mxu0 0
        %718 = vmatprep.subr.bf16.mxu0 0
        %719 = vmatpush1.bf16.msra.mxu0 0
        %720 = vmatprep.subr.bf16.mxu0 0
        %721 = vmatpush1.bf16.msra.mxu0 0
        %722 = vmatprep.subr.bf16.mxu0 0
        %723 = vmatpush1.bf16.msra.mxu0 0
        %724 = vmatprep.subr.bf16.mxu0 0
        %725 = vmatpush1.bf16.msra.mxu0 0
        %726 = vmatprep.subr.bf16.mxu0 0
        %727 = vmatpush1.bf16.msra.mxu0 0
        %728 = vmatprep.subr.bf16.mxu0 0
        %729 = vmatpush1.bf16.msra.mxu0 0
        %730 = vmatprep.subr.bf16.mxu0 0
        %731 = vmatpush1.bf16.msra.mxu0 0
        %732 = vmatprep.subr.bf16.mxu0 0
        %733 = vmatpush1.bf16.msra.mxu0 0
        %734 = vmatprep.subr.bf16.mxu0 0
        %735 = vmatpush1.bf16.msra.mxu0 0
        %736 = vmatprep.subr.bf16.mxu0 0
        %737 = vmatpush1.bf16.msra.mxu0 0
        %738 = vmatprep.subr.bf16.mxu0 0
        %739 = vmatpush1.bf16.msra.mxu0 0
        %740 = vmatprep.subr.bf16.mxu0 0
        %741 = vmatpush1.bf16.msra.mxu0 0
        %742 = vmatprep.subr.bf16.mxu0 0
        %743 = vmatpush1.bf16.msra.mxu0 0
        %744 = vmatprep.subr.bf16.mxu0 0
        %745 = vmatpush1.bf16.msra.mxu0 0
        %746 = vmatprep.mubr.bf16.mxu0 0
        %747 = vmatmul.mubr.bf16.gmra.mrb[0].mxu0 %v706
        %v748 = vpop.f32.mrb[0].mxu0
        %v749 = vadd.f32 %v692, %v748
        %v750 = vpop.f32.mrb[0].mxu0
        %v751 = vadd.f32 %v692, %v750
        %v752 = vpop.f32.mrb[0].mxu0
        %v753 = vadd.f32 %v697, %v752
        %v754 = vpop.f32.mrb[0].mxu0
        %v755 = vadd.f32 %v697, %v754
        %756 = vdwg.mxu0
        %v757 = vmax.f32 %v749, 0.0
        %v758 = vmax.f32 %v751, 0.0
        %v759 = vmax.f32 %v753, 0.0
        %v760 = vmax.f32 %v755, 0.0
        %761 = vst [vmem:[%s271] sm:$0xff] %v757
        %762 = vst [vmem:[%s271 + $0x8] sm:$0xff] %v758
        %763 = vst [vmem:[%s271 + $0x10] sm:$0xff] %v759
        %764 = vst [vmem:[%s271 + $0x18] sm:$0xff] %v760
        %s765 = sand.u32 %s181, 1
        %s766 = scalar_lea.sflag [#allocation4], %s765
        %s767 = sand.u32 %s181, 1
        %s768 = smul.addr %s767, 32
        %s769 = scalar_lea.vmem [#allocation3], %s768
        // Predicated region
        $region49: #{tpu_custom_call.1} parent=47 // pred_check
          %p770 = pneg %p191
        $region50: #{tpu_custom_call.1} parent=47 // pred_check_branch
          %772 = sbr.rel (%p770) target = $region52
        $region51: #{tpu_custom_call.1} parent=47 // pred_region
          %s774 = ssub.s32 512, 512
          %775 = vsyncadd %s766, %s774
          %s776 = smul.addr %s21, 4
          %s777 = smul.addr %s776, 128
          %s778 = scalar_lea.hbm %s7, %s777
          %s779 = sshll.u32 %s769, 4
          %s780 = int_to_ptr.vmem [resolvable:$true] %s779
          %785 = dma.vmem_to_hbm [thread:$0]  %s780, 512, %s778, %s766, 256, 256, 16
        $region52: #{tpu_custom_call.1} parent=47 // pred_fallthru
          _
      $region48: #{tpu_custom_call.1} parent=5 // pred_fallthru
        _
      %p786 = scmp.le.s32.totalorder 2, %s16
      // Predicated region
      $region53: #{tpu_custom_call.1} parent=5 // pred_check
        %p787 = pneg %p786
      $region54: #{tpu_custom_call.1} parent=5 // pred_check_branch
        %789 = sbr.rel (%p787) target = $region56
      $region55: #{tpu_custom_call.1} parent=5 // pred_region
        %s790 = ssub.s32 %s16, 2
        // Predicated region
        $region57: #{tpu_custom_call.1} parent=55 // pred_check
          %p791 = pneg %p197
        $region58: #{tpu_custom_call.1} parent=55 // pred_check_branch
          %793 = sbr.rel (%p791) target = $region60
        $region59: #{tpu_custom_call.1} parent=55 // pred_region
          %s794 = sand.u32 %s182, 1
          %s795 = scalar_lea.sflag [#allocation4], %s794
          %s796 = sand.u32 %s182, 1
          %s797 = smul.addr %s796, 32
          %s798 = scalar_lea.vmem [#allocation3], %s797
          %799 = dma.done %s795, 512
        $region60: #{tpu_custom_call.1} parent=55 // pred_fallthru
          _
      $region56: #{tpu_custom_call.1} parent=5 // pred_fallthru
        _
    $region6: #{tpu_custom_call.1} parent=1 // loop_footer
      %s20 = sadd.s32 1, %s16
    $region7: #{tpu_custom_call.1} parent=1 // loop_footer_branch
      %15 = sbr.rel target = $region3
    $region8: #{tpu_custom_call.1} parent=1 // loop_exit
      _
    %800 = vsyncpa [#allocation4], 1
    %s801 = scalar_lea.sflag [#allocation4], 1
    %802 = vsyncpa %s801, 1

</llo_original>
